<compile_context>
chip_gen: v7x
topology: tpu7x:2x2x1
jax: 0.10.0
libtpu: 0.0.40
codegen_flags: <defaults>
</compile_context>

<pallas_src>
import jax
import jax.numpy as jnp
from jax.experimental import pallas as pl
from jax.experimental.pallas import tpu as pltpu


def _round_up(v, m):
    return ((v + m - 1) // m) * m


def mlp_kernel(x_ref, w1_ref, b1_ref, w2_ref, b2_ref, w3_ref, b3_ref, o_ref):
    # Linear -> ReLU -> Linear -> ReLU -> Linear, fully VMEM-resident.
    # MXU inputs are the compute dtype (f32 or bf16); accumulation is f32;
    # bias adds and ReLU run on the VPU in f32.
    x = x_ref[...]
    h1 = jnp.dot(x, w1_ref[...], preferred_element_type=jnp.float32) + b1_ref[...]
    h1 = jnp.maximum(h1, 0.0).astype(w2_ref.dtype)
    h2 = jnp.dot(h1, w2_ref[...], preferred_element_type=jnp.float32) + b2_ref[...]
    h2 = jnp.maximum(h2, 0.0).astype(w3_ref.dtype)
    out = jnp.dot(h2, w3_ref[...], preferred_element_type=jnp.float32) + b3_ref[...]
    o_ref[...] = out.astype(o_ref.dtype)


def prepare_params(params, compute_dtype=jnp.bfloat16):
    """One-time param preparation (hoisted out of the per-call path).

    Casts the weight matrices to the compute dtype (bf16 by default: ~2x MXU
    issue rate and half the weight/activation DMA bytes on v6e/v7x, with f32
    accumulation preserving accuracy).  Biases stay f32 and are reshaped to
    (1, out) for lane-broadcast adds.  Call once and reuse the returned tuple.
    """
    w1, b1, w2, b2, w3, b3 = params

    def bias2d(b):
        return jnp.asarray(b, jnp.float32).reshape(1, -1)

    return (
        jnp.asarray(w1, compute_dtype), bias2d(b1),
        jnp.asarray(w2, compute_dtype), bias2d(b2),
        jnp.asarray(w3, compute_dtype), bias2d(b3),
    )


_SMALL_BATCH_MAX = 512  # grid collapses to (1,) at or below this many rows


@jax.jit
def maml_forward(x, prepared_params):
    """Forward pass of MAMLModel's MLP via a single pallas_call.

    x: (B, input_size) float32 (cast to the weights' compute dtype internally).
    prepared_params: output of `prepare_params` — weights (in, out) in the
                     compute dtype, biases (1, out) float32.
    """
    w1, b1, w2, b2, w3, b3 = prepared_params
    B, in_size = x.shape
    hidden = w1.shape[1]
    out_size = w3.shape[1]
    cdt = w1.dtype

    x_in = x.astype(cdt)

    if B <= _SMALL_BATCH_MAX:
        # Overhead-bound regime: one block == whole arrays, no padding at all.
        tile_b = B
        b_pad = B
    else:
        # Streaming regime: big row tiles (<=1024, multiple of 256 so bf16's
        # (16,128) packing holds), and at least 2 grid steps so v7x megacore
        # has work per TensorCore.
        tile_b = min(1024, _round_up((B + 1) // 2, 256))
        b_pad = _round_up(B, tile_b)
        if b_pad != B:
            x_in = jnp.pad(x_in, ((0, b_pad - B), (0, 0)))

    grid = (b_pad // tile_b,)

    # NOTE: feature dims (in=32, out=8, bias rows=1) are full-array blocks, so
    # the (8,128) divisibility rule is waived; no lane padding / output slicing.
    # TODO(synk): for hidden >~ 2K on v7x, add pipeline_mode=pl.Buffered(1) to
    # the three weight BlockSpecs (constant index_map -> no double-buffer needed).
    out = pl.pallas_call(
        mlp_kernel,
        out_shape=jax.ShapeDtypeStruct((b_pad, out_size), jnp.float32),
        grid_spec=pltpu.PrefetchScalarGridSpec(
            num_scalar_prefetch=0,
            grid=grid,
            in_specs=[
                pl.BlockSpec((tile_b, in_size), lambda i: (i, 0)),
                pl.BlockSpec((in_size, hidden), lambda i: (0, 0)),
                pl.BlockSpec((1, hidden), lambda i: (0, 0)),
                pl.BlockSpec((hidden, hidden), lambda i: (0, 0)),
                pl.BlockSpec((1, hidden), lambda i: (0, 0)),
                pl.BlockSpec((hidden, out_size), lambda i: (0, 0)),
                pl.BlockSpec((1, out_size), lambda i: (0, 0)),
            ],
            out_specs=pl.BlockSpec((tile_b, out_size), lambda i: (i, 0)),
        ),
        compiler_params=pltpu.CompilerParams(
            dimension_semantics=("parallel",),
        ),
    )(x_in, w1, b1, w2, b2, w3, b3)

    return out if b_pad == B else out[:B]


def init_params(key, input_size, output_size, hidden_size=128):
    # Deterministic init mirroring PyTorch Linear (stored as (in, out)).
    ks = jax.random.split(key, 6)

    def lin(kw, kb, fan_in, fan_out):
        bound = 1.0 / jnp.sqrt(fan_in)
        w = jax.random.uniform(kw, (fan_in, fan_out), jnp.float32, -bound, bound)
        b = jax.random.uniform(kb, (1, fan_out), jnp.float32, -bound, bound)
        return w, b

    w1, b1 = lin(ks[0], ks[1], input_size, hidden_size)
    w2, b2 = lin(ks[2], ks[3], hidden_size, hidden_size)
    w3, b3 = lin(ks[4], ks[5], hidden_size, output_size)
    return (w1, b1, w2, b2, w3, b3)


if __name__ == "__main__":
    key = jax.random.PRNGKey(0)
    k_x, k_p, k_big = jax.random.split(key, 3)

    batch = 16
    input_size = 32
    hidden_size = 128
    output_size = 8

    x = jax.random.normal(k_x, (batch, input_size), dtype=jnp.float32)
    params = init_params(k_p, input_size, output_size, hidden_size)

    # Pure-JAX reference of the same forward pass.
    w1, b1, w2, b2, w3, b3 = params

    def ref_fwd(xx):
        h = jnp.maximum(xx @ w1 + b1, 0.0)
        h = jnp.maximum(h @ w2 + b2, 0.0)
        return h @ w3 + b3

    ref = ref_fwd(x)

    # f32 path: bit-faithful to the PyTorch module semantics.
    params_f32 = prepare_params(params, compute_dtype=jnp.float32)
    out_f32 = jax.block_until_ready(maml_forward(x, params_f32))
    assert out_f32.shape == (batch, output_size)
    assert jnp.allclose(out_f32, ref, atol=1e-5, rtol=1e-5)

    # Default bf16 compute path: bf16 MXU inputs, f32 accumulation.
    params_bf16 = prepare_params(params)
    out_bf16 = jax.block_until_ready(maml_forward(x, params_bf16))
    assert out_bf16.shape == (batch, output_size)
    assert jnp.allclose(out_bf16, ref, atol=2e-2, rtol=2e-2)

    # Large stacked-task batch: exercises the tiled / megacore branch (grid >= 2).
    big_b = 1024
    x_big = jax.random.normal(k_big, (big_b, input_size), dtype=jnp.float32)
    out_big = jax.block_until_ready(maml_forward(x_big, params_bf16))
    assert out_big.shape == (big_b, output_size)
    assert jnp.allclose(out_big, ref_fwd(x_big), atol=2e-2, rtol=2e-2)

    print("KERNEL_OK")
</pallas_src>

<mosaic_0001>
module attributes {stable_mosaic.version = 11 : i64} {
  func.func @mlp_kernel(%arg0: i32, %arg1: memref<16x32xf32, #tpu.memory_space<vmem>>, %arg2: memref<32x128xf32, #tpu.memory_space<vmem>>, %arg3: memref<1x128xf32, #tpu.memory_space<vmem>>, %arg4: memref<128x128xf32, #tpu.memory_space<vmem>>, %arg5: memref<1x128xf32, #tpu.memory_space<vmem>>, %arg6: memref<128x8xf32, #tpu.memory_space<vmem>>, %arg7: memref<1x8xf32, #tpu.memory_space<vmem>>, %arg8: memref<16x8xf32, #tpu.memory_space<vmem>>) attributes {dimension_semantics = [#tpu.dimension_semantics<parallel>], iteration_bounds = array<i64: 1>, scalar_prefetch = 0 : i64, scratch_operands = 0 : i64, tpu.core_type = #tpu.core_type<tc>, window_params = [{transform_indices = @transform_0, window_bounds = array<i64: 16, 32>}, {pipeline_mode = #tpu.pipeline_mode<synchronous>, transform_indices = @transform_1, window_bounds = array<i64: 32, 128>}, {pipeline_mode = #tpu.pipeline_mode<synchronous>, transform_indices = @transform_2, window_bounds = array<i64: 1, 128>}, {pipeline_mode = #tpu.pipeline_mode<synchronous>, transform_indices = @transform_3, window_bounds = array<i64: 128, 128>}, {pipeline_mode = #tpu.pipeline_mode<synchronous>, transform_indices = @transform_4, window_bounds = array<i64: 1, 128>}, {pipeline_mode = #tpu.pipeline_mode<synchronous>, transform_indices = @transform_5, window_bounds = array<i64: 128, 8>}, {pipeline_mode = #tpu.pipeline_mode<synchronous>, transform_indices = @transform_6, window_bounds = array<i64: 1, 8>}, {transform_indices = @transform_7, window_bounds = array<i64: 16, 8>}]} {
    %c0 = arith.constant 0 : index
    %c0_0 = arith.constant 0 : index
    %0 = vector.load %arg1[%c0, %c0_0] : memref<16x32xf32, #tpu.memory_space<vmem>>, vector<16x32xf32>
    %c0_1 = arith.constant 0 : index
    %c0_2 = arith.constant 0 : index
    %1 = vector.load %arg2[%c0_1, %c0_2] : memref<32x128xf32, #tpu.memory_space<vmem>>, vector<32x128xf32>
    %cst = arith.constant dense<0.000000e+00> : vector<16x128xf32>
    %2 = tpu.matmul %0, %1, %cst {dimension_numbers = #tpu.dot_dimension_numbers<[1], [0], [0], [1], [0, 0, 1, 1], [], []>} : vector<16x32xf32>, vector<32x128xf32>, vector<16x128xf32> -> vector<16x128xf32>
    %c0_3 = arith.constant 0 : index
    %c0_4 = arith.constant 0 : index
    %3 = vector.load %arg3[%c0_3, %c0_4] : memref<1x128xf32, #tpu.memory_space<vmem>>, vector<1x128xf32>
    %4 = vector.broadcast %3 : vector<1x128xf32> to vector<16x128xf32>
    %5 = arith.addf %2, %4 : vector<16x128xf32>
    %cst_5 = arith.constant 0.000000e+00 : f32
    %6 = vector.broadcast %cst_5 : f32 to vector<16x128xf32>
    %7 = arith.maximumf %5, %6 : vector<16x128xf32>
    %c0_6 = arith.constant 0 : index
    %c0_7 = arith.constant 0 : index
    %8 = vector.load %arg4[%c0_6, %c0_7] : memref<128x128xf32, #tpu.memory_space<vmem>>, vector<128x128xf32>
    %cst_8 = arith.constant dense<0.000000e+00> : vector<16x128xf32>
    %9 = tpu.matmul %7, %8, %cst_8 {dimension_numbers = #tpu.dot_dimension_numbers<[1], [0], [0], [1], [0, 0, 1, 1], [], []>} : vector<16x128xf32>, vector<128x128xf32>, vector<16x128xf32> -> vector<16x128xf32>
    %c0_9 = arith.constant 0 : index
    %c0_10 = arith.constant 0 : index
    %10 = vector.load %arg5[%c0_9, %c0_10] : memref<1x128xf32, #tpu.memory_space<vmem>>, vector<1x128xf32>
    %11 = vector.broadcast %10 : vector<1x128xf32> to vector<16x128xf32>
    %12 = arith.addf %9, %11 : vector<16x128xf32>
    %cst_11 = arith.constant 0.000000e+00 : f32
    %13 = vector.broadcast %cst_11 : f32 to vector<16x128xf32>
    %14 = arith.maximumf %12, %13 : vector<16x128xf32>
    %c0_12 = arith.constant 0 : index
    %c0_13 = arith.constant 0 : index
    %15 = vector.load %arg6[%c0_12, %c0_13] : memref<128x8xf32, #tpu.memory_space<vmem>>, vector<128x8xf32>
    %cst_14 = arith.constant dense<0.000000e+00> : vector<16x8xf32>
    %16 = tpu.matmul %14, %15, %cst_14 {dimension_numbers = #tpu.dot_dimension_numbers<[1], [0], [0], [1], [0, 0, 1, 1], [], []>} : vector<16x128xf32>, vector<128x8xf32>, vector<16x8xf32> -> vector<16x8xf32>
    %c0_15 = arith.constant 0 : index
    %c0_16 = arith.constant 0 : index
    %17 = vector.load %arg7[%c0_15, %c0_16] : memref<1x8xf32, #tpu.memory_space<vmem>>, vector<1x8xf32>
    %18 = vector.broadcast %17 : vector<1x8xf32> to vector<16x8xf32>
    %19 = arith.addf %16, %18 : vector<16x8xf32>
    %c0_17 = arith.constant 0 : index
    %c0_18 = arith.constant 0 : index
    %20 = vector.load %arg8[%c0_17, %c0_18] : memref<16x8xf32, #tpu.memory_space<vmem>>, vector<16x8xf32>
    tpu.vector_store %arg8[%c0_17, %c0_18], %19 {strides = array<i32>} : memref<16x8xf32, #tpu.memory_space<vmem>>, vector<16x8xf32>,
    return
  }
  func.func @transform_0(%arg0: i32) -> (i32, i32) {
    %c0_i32 = arith.constant 0 : i32
    %c0_i32_0 = arith.constant 0 : i32
    return %arg0, %c0_i32 : i32, i32
  }
  func.func @transform_1(%arg0: i32) -> (i32, i32) {
    %c0_i32 = arith.constant 0 : i32
    %c0_i32_0 = arith.constant 0 : i32
    %c0_i32_1 = arith.constant 0 : i32
    return %c0_i32, %c0_i32_0 : i32, i32
  }
  func.func @transform_2(%arg0: i32) -> (i32, i32) {
    %c0_i32 = arith.constant 0 : i32
    %c0_i32_0 = arith.constant 0 : i32
    %c0_i32_1 = arith.constant 0 : i32
    return %c0_i32, %c0_i32_0 : i32, i32
  }
  func.func @transform_3(%arg0: i32) -> (i32, i32) {
    %c0_i32 = arith.constant 0 : i32
    %c0_i32_0 = arith.constant 0 : i32
    %c0_i32_1 = arith.constant 0 : i32
    return %c0_i32, %c0_i32_0 : i32, i32
  }
  func.func @transform_4(%arg0: i32) -> (i32, i32) {
    %c0_i32 = arith.constant 0 : i32
    %c0_i32_0 = arith.constant 0 : i32
    %c0_i32_1 = arith.constant 0 : i32
    return %c0_i32, %c0_i32_0 : i32, i32
  }
  func.func @transform_5(%arg0: i32) -> (i32, i32) {
    %c0_i32 = arith.constant 0 : i32
    %c0_i32_0 = arith.constant 0 : i32
    %c0_i32_1 = arith.constant 0 : i32
    return %c0_i32, %c0_i32_0 : i32, i32
  }
  func.func @transform_6(%arg0: i32) -> (i32, i32) {
    %c0_i32 = arith.constant 0 : i32
    %c0_i32_0 = arith.constant 0 : i32
    %c0_i32_1 = arith.constant 0 : i32
    return %c0_i32, %c0_i32_0 : i32, i32
  }
  func.func @transform_7(%arg0: i32) -> (i32, i32) {
    %c0_i32 = arith.constant 0 : i32
    %c0_i32_0 = arith.constant 0 : i32
    return %arg0, %c0_i32 : i32, i32
  }
}

</mosaic_0001>

<llo_original>
// kernel: maml_forward.1
$region0: #{maml_forward.1}
  #allocation0 [shape = 'u32[]', space=smem, size = 0x4, offset = 0x4, fixed_abs, tag = 'smem constant byte address 0x4 - core index']
  #allocation1 [shape = 'u32[144,128]{1,0:T(1,128)}', space=vmem, size = 0x12000, scoped, tag = 'internal scratch']
  %s0 = inlined_call_operand.vmem [shape: f32[16,32], index: 0, kind: input, shape index: {}]
  %s1 = inlined_call_operand.hbm [shape: f32[32,128], index: 1, kind: input, shape index: {}]
  %s2 = inlined_call_operand.vmem [shape: f32[1,128], index: 2, kind: input, shape index: {}]
  %s3 = inlined_call_operand.vmem [shape: f32[128,128], index: 3, kind: input, shape index: {}]
  %s4 = inlined_call_operand.vmem [shape: f32[1,128], index: 4, kind: input, shape index: {}]
  %s5 = inlined_call_operand.vmem [shape: f32[128,8], index: 5, kind: input, shape index: {}]
  %s6 = inlined_call_operand.vmem [shape: f32[1,8], index: 6, kind: input, shape index: {}]
  %s7 = inlined_call_operand.vmem [shape: f32[16,8], index: 7, kind: output, shape index: {}]
  %s8 = sld [smem:[#allocation0]]
  $region42: #{maml_forward.1} parent=0
    _
  %s10 = ssub.s32 1, %s8
  %s11 = scalar_select 0, %s10, %s8
  $region1: #{maml_forward.1} parent=0
    #allocation2 [shape = 'u8[16384]{0}', space=vmem, size = 0x4000, scoped, tag = 'input window, operand 1, single buffered']
    #allocation3 [shape = 's32[1]{0}', space=sflag, size = 0x4, scoped, tag = 'scoped memory for maml_forward.1']
    %12 = vsyncpa [#allocation3], 0
    // Predicated region
    $region2: #{maml_forward.1} parent=1 // pred_check
      _
    $region3: #{maml_forward.1} parent=1 // pred_check_branch
      %14 = sbr.rel (0) target = $region5
    $region4: #{maml_forward.1} parent=1 // pred_region
      _
    $region5: #{maml_forward.1} parent=1 // pred_fallthru
      _
    // Predicated region
    $region6: #{maml_forward.1} parent=1 // pred_check
      _
    $region7: #{maml_forward.1} parent=1 // pred_check_branch
      %16 = sbr.rel (0) target = $region9
    $region8: #{maml_forward.1} parent=1 // pred_region
      %s18 = ssub.s32 512, 512
      %19 = vsyncadd [#allocation3], %s18
      %s20 = sshll.u32 [#allocation2], 4
      %s21 = int_to_ptr.vmem [resolvable:$true] %s20
      %26 = dma.hbm_to_vmem [thread:$0]  %s1, 512, %s21, [#allocation3], 128, 128, 8
    $region9: #{maml_forward.1} parent=1 // pred_fallthru
      _
    // Predicated region
    $region10: #{maml_forward.1} parent=1 // pred_check
      _
    $region11: #{maml_forward.1} parent=1 // pred_check_branch
      %28 = sbr.rel (0) target = $region13
    $region12: #{maml_forward.1} parent=1 // pred_region
      _
    $region13: #{maml_forward.1} parent=1 // pred_fallthru
      _
    // Predicated region
    $region14: #{maml_forward.1} parent=1 // pred_check
      _
    $region15: #{maml_forward.1} parent=1 // pred_check_branch
      %30 = sbr.rel (0) target = $region17
    $region16: #{maml_forward.1} parent=1 // pred_region
      _
    $region17: #{maml_forward.1} parent=1 // pred_fallthru
      _
    // Predicated region
    $region18: #{maml_forward.1} parent=1 // pred_check
      _
    $region19: #{maml_forward.1} parent=1 // pred_check_branch
      %32 = sbr.rel (0) target = $region21
    $region20: #{maml_forward.1} parent=1 // pred_region
      _
    $region21: #{maml_forward.1} parent=1 // pred_fallthru
      _
    // Predicated region
    $region22: #{maml_forward.1} parent=1 // pred_check
      _
    $region23: #{maml_forward.1} parent=1 // pred_check_branch
      %34 = sbr.rel (0) target = $region25
    $region24: #{maml_forward.1} parent=1 // pred_region
      _
    $region25: #{maml_forward.1} parent=1 // pred_fallthru
      _
    // Predicated region
    $region26: #{maml_forward.1} parent=1 // pred_check
      _
    $region27: #{maml_forward.1} parent=1 // pred_check_branch
      %36 = sbr.rel (0) target = $region29
    $region28: #{maml_forward.1} parent=1 // pred_region
      _
    $region29: #{maml_forward.1} parent=1 // pred_fallthru
      _
    // Predicated region
    $region30: #{maml_forward.1} parent=1 // pred_check
      _
    $region31: #{maml_forward.1} parent=1 // pred_check_branch
      %38 = sbr.rel (0) target = $region33
    $region32: #{maml_forward.1} parent=1 // pred_region
      %39 = dma.done [#allocation3], 512
    $region33: #{maml_forward.1} parent=1 // pred_fallthru
      _
    %v40 = vld [vmem:[%s0] sm:$0xff]
    %v41 = vld [vmem:[%s0 + $0x8] sm:$0xff]
    %v42 = vld [vmem:[#allocation2] sm:$0xff]
    %v43 = vld [vmem:[#allocation2 + $0x8] sm:$0xff]
    %v44 = vld [vmem:[#allocation2 + $0x10] sm:$0xff]
    %v45 = vld [vmem:[#allocation2 + $0x18] sm:$0xff]
    %v46 = vld [vmem:[%s2] sm:$0x1]
    %v48 = vlaneseq
    %v49 = vshrl.u32 %v48, 7
    %v50 = vsub.s32 0, %v49
    %v51 = vrot.slane %v46, %v50
    %vm53 = vcmask 261120
    %v55 = vsel %vm53, %v40, 0
    %v58 = vsel %vm53, %v41, 0
    %60 = vmatprep.subr.mxu0 0.0
    %61 = vmatpush1.msra.mxu0 %v42
    %62 = vmatprep.subr.mxu0 0.0
    %63 = vmatpush1.msra.mxu0 %v43
    %64 = vmatprep.subr.mxu0 0.0
    %65 = vmatpush1.msra.mxu0 %v44
    %66 = vmatprep.subr.mxu0 0.0
    %67 = vmatpush1.msra.mxu0 %v45
    %68 = vmatprep.subr.mxu0 0.0
    %69 = vmatpush1.msra.mxu0 0.0
    %70 = vmatprep.subr.mxu0 0.0
    %71 = vmatpush1.msra.mxu0 0.0
    %72 = vmatprep.subr.mxu0 0.0
    %73 = vmatpush1.msra.mxu0 0.0
    %74 = vmatprep.subr.mxu0 0.0
    %75 = vmatpush1.msra.mxu0 0.0
    %76 = vmatprep.subr.mxu0 0.0
    %77 = vmatpush1.msra.mxu0 0.0
    %78 = vmatprep.subr.mxu0 0.0
    %79 = vmatpush1.msra.mxu0 0.0
    %80 = vmatprep.subr.mxu0 0.0
    %81 = vmatpush1.msra.mxu0 0.0
    %82 = vmatprep.subr.mxu0 0.0
    %83 = vmatpush1.msra.mxu0 0.0
    %84 = vmatprep.subr.mxu0 0.0
    %85 = vmatpush1.msra.mxu0 0.0
    %86 = vmatprep.subr.mxu0 0.0
    %87 = vmatpush1.msra.mxu0 0.0
    %88 = vmatprep.subr.mxu0 0.0
    %89 = vmatpush1.msra.mxu0 0.0
    %90 = vmatprep.subr.mxu0 0.0
    %91 = vmatpush1.msra.mxu0 0.0
    %92 = vmatprep.subr.mxu0 0.0
    %93 = vmatpush1.msra.mxu0 0.0
    %94 = vmatprep.subr.mxu0 0.0
    %95 = vmatpush1.msra.mxu0 0.0
    %96 = vmatprep.subr.mxu0 0.0
    %97 = vmatpush1.msra.mxu0 0.0
    %98 = vmatprep.subr.mxu0 0.0
    %99 = vmatpush1.msra.mxu0 0.0
    %100 = vmatprep.subr.mxu0 0.0
    %101 = vmatpush1.msra.mxu0 0.0
    %102 = vmatprep.subr.mxu0 0.0
    %103 = vmatpush1.msra.mxu0 0.0
    %104 = vmatprep.subr.mxu0 0.0
    %105 = vmatpush1.msra.mxu0 0.0
    %106 = vmatprep.subr.mxu0 0.0
    %107 = vmatpush1.msra.mxu0 0.0
    %108 = vmatprep.subr.mxu0 0.0
    %109 = vmatpush1.msra.mxu0 0.0
    %110 = vmatprep.subr.mxu0 0.0
    %111 = vmatpush1.msra.mxu0 0.0
    %112 = vmatprep.subr.mxu0 0.0
    %113 = vmatpush1.msra.mxu0 0.0
    %114 = vmatprep.subr.mxu0 0.0
    %115 = vmatpush1.msra.mxu0 0.0
    %116 = vmatprep.subr.mxu0 0.0
    %117 = vmatpush1.msra.mxu0 0.0
    %118 = vmatprep.subr.mxu0 0.0
    %119 = vmatpush1.msra.mxu0 0.0
    %120 = vmatprep.subr.mxu0 0.0
    %121 = vmatpush1.msra.mxu0 0.0
    %122 = vmatprep.subr.mxu0 0.0
    %123 = vmatpush1.msra.mxu0 0.0
    %124 = vmatprep.mubr.f32.mxu0 0.0
    %125 = vmatmul.mubr.f32.gmra.mrb[0].mxu0 %v55
    %v126 = vpop.f32.mrb[0].mxu0
    %v127 = vadd.f32 %v51, %v126
    %v128 = vpop.f32.mrb[0].mxu0
    %129 = vmatprep.mubr.f32.mxu0 0.0
    %130 = vmatmul.mubr.f32.gmra.mrb[0].mxu0 %v58
    %v131 = vpop.f32.mrb[0].mxu0
    %v132 = vadd.f32 %v51, %v131
    %v133 = vpop.f32.mrb[0].mxu0
    %134 = vdwg.mxu0
    %v135 = vmax.f32 %v127, 0.0
    %v136 = vmax.f32 %v132, 0.0
    %v137 = vld [vmem:[%s3] sm:$0xff]
    %v138 = vld [vmem:[%s3 + $0x8] sm:$0xff]
    %v139 = vld [vmem:[%s3 + $0x10] sm:$0xff]
    %v140 = vld [vmem:[%s3 + $0x18] sm:$0xff]
    %v141 = vld [vmem:[%s3 + $0x20] sm:$0xff]
    %v142 = vld [vmem:[%s3 + $0x28] sm:$0xff]
    %v143 = vld [vmem:[%s3 + $0x30] sm:$0xff]
    %v144 = vld [vmem:[%s3 + $0x38] sm:$0xff]
    %v145 = vld [vmem:[%s3 + $0x40] sm:$0xff]
    %v146 = vld [vmem:[%s3 + $0x48] sm:$0xff]
    %v147 = vld [vmem:[%s3 + $0x50] sm:$0xff]
    %v148 = vld [vmem:[%s3 + $0x58] sm:$0xff]
    %v149 = vld [vmem:[%s3 + $0x60] sm:$0xff]
    %v150 = vld [vmem:[%s3 + $0x68] sm:$0xff]
    %v151 = vld [vmem:[%s3 + $0x70] sm:$0xff]
    %v152 = vld [vmem:[%s3 + $0x78] sm:$0xff]
    %v153 = vld [vmem:[%s4] sm:$0x1]
    %v155 = vlaneseq
    %v156 = vshrl.u32 %v155, 7
    %v157 = vsub.s32 0, %v156
    %v158 = vrot.slane %v153, %v157
    %160 = vmatprep.subr.mxu0 0.0
    %161 = vmatpush1.msra.mxu0 %v137
    %162 = vmatprep.subr.mxu0 0.0
    %163 = vmatpush1.msra.mxu0 %v138
    %164 = vmatprep.subr.mxu0 0.0
    %165 = vmatpush1.msra.mxu0 %v139
    %166 = vmatprep.subr.mxu0 0.0
    %167 = vmatpush1.msra.mxu0 %v140
    %168 = vmatprep.subr.mxu0 0.0
    %169 = vmatpush1.msra.mxu0 %v141
    %170 = vmatprep.subr.mxu0 0.0
    %171 = vmatpush1.msra.mxu0 %v142
    %172 = vmatprep.subr.mxu0 0.0
    %173 = vmatpush1.msra.mxu0 %v143
    %174 = vmatprep.subr.mxu0 0.0
    %175 = vmatpush1.msra.mxu0 %v144
    %176 = vmatprep.subr.mxu0 0.0
    %177 = vmatpush1.msra.mxu0 %v145
    %178 = vmatprep.subr.mxu0 0.0
    %179 = vmatpush1.msra.mxu0 %v146
    %180 = vmatprep.subr.mxu0 0.0
    %181 = vmatpush1.msra.mxu0 %v147
    %182 = vmatprep.subr.mxu0 0.0
    %183 = vmatpush1.msra.mxu0 %v148
    %184 = vmatprep.subr.mxu0 0.0
    %185 = vmatpush1.msra.mxu0 %v149
    %186 = vmatprep.subr.mxu0 0.0
    %187 = vmatpush1.msra.mxu0 %v150
    %188 = vmatprep.subr.mxu0 0.0
    %189 = vmatpush1.msra.mxu0 %v151
    %190 = vmatprep.subr.mxu0 0.0
    %191 = vmatpush1.msra.mxu0 %v152
    %192 = vmatprep.subr.mxu0 0.0
    %193 = vmatpush1.msra.mxu0 0.0
    %194 = vmatprep.subr.mxu0 0.0
    %195 = vmatpush1.msra.mxu0 0.0
    %196 = vmatprep.subr.mxu0 0.0
    %197 = vmatpush1.msra.mxu0 0.0
    %198 = vmatprep.subr.mxu0 0.0
    %199 = vmatpush1.msra.mxu0 0.0
    %200 = vmatprep.subr.mxu0 0.0
    %201 = vmatpush1.msra.mxu0 0.0
    %202 = vmatprep.subr.mxu0 0.0
    %203 = vmatpush1.msra.mxu0 0.0
    %204 = vmatprep.subr.mxu0 0.0
    %205 = vmatpush1.msra.mxu0 0.0
    %206 = vmatprep.subr.mxu0 0.0
    %207 = vmatpush1.msra.mxu0 0.0
    %208 = vmatprep.subr.mxu0 0.0
    %209 = vmatpush1.msra.mxu0 0.0
    %210 = vmatprep.subr.mxu0 0.0
    %211 = vmatpush1.msra.mxu0 0.0
    %212 = vmatprep.subr.mxu0 0.0
    %213 = vmatpush1.msra.mxu0 0.0
    %214 = vmatprep.subr.mxu0 0.0
    %215 = vmatpush1.msra.mxu0 0.0
    %216 = vmatprep.subr.mxu0 0.0
    %217 = vmatpush1.msra.mxu0 0.0
    %218 = vmatprep.subr.mxu0 0.0
    %219 = vmatpush1.msra.mxu0 0.0
    %220 = vmatprep.subr.mxu0 0.0
    %221 = vmatpush1.msra.mxu0 0.0
    %222 = vmatprep.subr.mxu0 0.0
    %223 = vmatpush1.msra.mxu0 0.0
    %224 = vmatprep.mubr.f32.mxu0 0.0
    %225 = vmatmul.mubr.f32.gmra.mrb[0].mxu0 %v135
    %v226 = vpop.f32.mrb[0].mxu0
    %v227 = vadd.f32 %v158, %v226
    %v228 = vpop.f32.mrb[0].mxu0
    %229 = vmatprep.mubr.f32.mxu0 0.0
    %230 = vmatmul.mubr.f32.gmra.mrb[0].mxu0 %v136
    %v231 = vpop.f32.mrb[0].mxu0
    %v232 = vadd.f32 %v158, %v231
    %v233 = vpop.f32.mrb[0].mxu0
    %234 = vdwg.mxu0
    %v235 = vmax.f32 %v227, 0.0
    %v236 = vmax.f32 %v232, 0.0
    %v237 = vld [vmem:[%s5] sm:$0xff]
    %v238 = vld [vmem:[%s5 + $0x8] sm:$0xff]
    %v239 = vld [vmem:[%s5 + $0x10] sm:$0xff]
    %v240 = vld [vmem:[%s5 + $0x18] sm:$0xff]
    %v241 = vld [vmem:[%s5 + $0x20] sm:$0xff]
    %v242 = vld [vmem:[%s5 + $0x28] sm:$0xff]
    %v243 = vld [vmem:[%s5 + $0x30] sm:$0xff]
    %v244 = vld [vmem:[%s5 + $0x38] sm:$0xff]
    %v245 = vld [vmem:[%s5 + $0x40] sm:$0xff]
    %v246 = vld [vmem:[%s5 + $0x48] sm:$0xff]
    %v247 = vld [vmem:[%s5 + $0x50] sm:$0xff]
    %v248 = vld [vmem:[%s5 + $0x58] sm:$0xff]
    %v249 = vld [vmem:[%s5 + $0x60] sm:$0xff]
    %v250 = vld [vmem:[%s5 + $0x68] sm:$0xff]
    %v251 = vld [vmem:[%s5 + $0x70] sm:$0xff]
    %v252 = vld [vmem:[%s5 + $0x78] sm:$0xff]
    %v253 = vld [vmem:[%s6] sm:$0x1]
    %v255 = vlaneseq
    %v256 = vshrl.u32 %v255, 7
    %v257 = vsub.s32 0, %v256
    %v258 = vrot.slane %v253, %v257
    %260 = vmatprep.subr.mxu0 0.0
    %261 = vmatpush1.msra.mxu0 %v237
    %262 = vmatprep.subr.mxu0 0.0
    %263 = vmatpush1.msra.mxu0 %v238
    %264 = vmatprep.subr.mxu0 0.0
    %265 = vmatpush1.msra.mxu0 %v239
    %266 = vmatprep.subr.mxu0 0.0
    %267 = vmatpush1.msra.mxu0 %v240
    %268 = vmatprep.subr.mxu0 0.0
    %269 = vmatpush1.msra.mxu0 %v241
    %270 = vmatprep.subr.mxu0 0.0
    %271 = vmatpush1.msra.mxu0 %v242
    %272 = vmatprep.subr.mxu0 0.0
    %273 = vmatpush1.msra.mxu0 %v243
    %274 = vmatprep.subr.mxu0 0.0
    %275 = vmatpush1.msra.mxu0 %v244
    %276 = vmatprep.subr.mxu0 0.0
    %277 = vmatpush1.msra.mxu0 %v245
    %278 = vmatprep.subr.mxu0 0.0
    %279 = vmatpush1.msra.mxu0 %v246
    %280 = vmatprep.subr.mxu0 0.0
    %281 = vmatpush1.msra.mxu0 %v247
    %282 = vmatprep.subr.mxu0 0.0
    %283 = vmatpush1.msra.mxu0 %v248
    %284 = vmatprep.subr.mxu0 0.0
    %285 = vmatpush1.msra.mxu0 %v249
    %286 = vmatprep.subr.mxu0 0.0
    %287 = vmatpush1.msra.mxu0 %v250
    %288 = vmatprep.subr.mxu0 0.0
    %289 = vmatpush1.msra.mxu0 %v251
    %290 = vmatprep.subr.mxu0 0.0
    %291 = vmatpush1.msra.mxu0 %v252
    %292 = vmatprep.subr.mxu0 0.0
    %293 = vmatpush1.msra.mxu0 0.0
    %294 = vmatprep.subr.mxu0 0.0
    %295 = vmatpush1.msra.mxu0 0.0
    %296 = vmatprep.subr.mxu0 0.0
    %297 = vmatpush1.msra.mxu0 0.0
    %298 = vmatprep.subr.mxu0 0.0
    %299 = vmatpush1.msra.mxu0 0.0
    %300 = vmatprep.subr.mxu0 0.0
    %301 = vmatpush1.msra.mxu0 0.0
    %302 = vmatprep.subr.mxu0 0.0
    %303 = vmatpush1.msra.mxu0 0.0
    %304 = vmatprep.subr.mxu0 0.0
    %305 = vmatpush1.msra.mxu0 0.0
    %306 = vmatprep.subr.mxu0 0.0
    %307 = vmatpush1.msra.mxu0 0.0
    %308 = vmatprep.subr.mxu0 0.0
    %309 = vmatpush1.msra.mxu0 0.0
    %310 = vmatprep.subr.mxu0 0.0
    %311 = vmatpush1.msra.mxu0 0.0
    %312 = vmatprep.subr.mxu0 0.0
    %313 = vmatpush1.msra.mxu0 0.0
    %314 = vmatprep.subr.mxu0 0.0
    %315 = vmatpush1.msra.mxu0 0.0
    %316 = vmatprep.subr.mxu0 0.0
    %317 = vmatpush1.msra.mxu0 0.0
    %318 = vmatprep.subr.mxu0 0.0
    %319 = vmatpush1.msra.mxu0 0.0
    %320 = vmatprep.subr.mxu0 0.0
    %321 = vmatpush1.msra.mxu0 0.0
    %322 = vmatprep.subr.mxu0 0.0
    %323 = vmatpush1.msra.mxu0 0.0
    %324 = vmatprep.mubr.f32.mxu0 0.0
    %325 = vmatmul.mubr.f32.gmra.mrb[0].mxu0 %v235
    %v326 = vpop.f32.mrb[0].mxu0
    %v327 = vadd.f32 %v258, %v326
    %v328 = vpop.f32.mrb[0].mxu0
    %329 = vmatprep.mubr.f32.mxu0 0.0
    %330 = vmatmul.mubr.f32.gmra.mrb[0].mxu0 %v236
    %v331 = vpop.f32.mrb[0].mxu0
    %v332 = vadd.f32 %v258, %v331
    %v333 = vpop.f32.mrb[0].mxu0
    %334 = vdwg.mxu0
    %vm335 = vcmask 64512
    %336 = vst.msk [vmem:[%s7] sm:$0xff] %vm335, %v327
    %337 = vst.msk [vmem:[%s7 + $0x8] sm:$0xff] %vm335, %v332
    // Predicated region
    $region34: #{maml_forward.1} parent=1 // pred_check
      _
    $region35: #{maml_forward.1} parent=1 // pred_check_branch
      %339 = sbr.rel (0) target = $region37
    $region36: #{maml_forward.1} parent=1 // pred_region
      _
    $region37: #{maml_forward.1} parent=1 // pred_fallthru
      _
    // Predicated region
    $region38: #{maml_forward.1} parent=1 // pred_check
      _
    $region39: #{maml_forward.1} parent=1 // pred_check_branch
      %341 = sbr.rel (0) target = $region41
    $region40: #{maml_forward.1} parent=1 // pred_region
      _
    $region41: #{maml_forward.1} parent=1 // pred_fallthru
      _
    %342 = vsyncpa [#allocation3], 1

</llo_original>
